<compile_context>
chip_gen: v7x
topology: tpu7x:2x2x1
jax: 0.10.0
libtpu: 0.0.40
codegen_flags: <defaults>
</compile_context>

<pallas_src>
import functools

import jax
import jax.numpy as jnp
from jax.experimental import pallas as pl
from jax.experimental.pallas import tpu as pltpu


def _round_up(x, n):
    return ((x + n - 1) // n) * n


def _cosface_lse_kernel(x_ref, t_ref, lse_ref, m_sc, l_sc, *, s, m, C, TC):
    """Per-row online logsumexp of z = s*(x - one_hot(t)*m) over class tiles."""
    kc = pl.program_id(1)

    @pl.when(kc == 0)
    def _():
        m_sc[...] = jnp.full_like(m_sc, -jnp.inf)
        l_sc[...] = jnp.zeros_like(l_sc)

    x = x_ref[...].astype(jnp.float32)                      # (TB, TC)
    z = s * x

    need_col = (m != 0.0) or (C % TC != 0)
    if need_col:
        # Loop-invariant local column index; offsets are applied scalar-side.
        col = jax.lax.broadcasted_iota(jnp.int32, x.shape, dimension=1)

    if m != 0.0:
        # Subtract s*m from the target column (only column that can match
        # t - kc*TC inside this tile's local frame).
        t_local = t_ref[...] - kc * TC                      # (TB, 1) int32
        z = z - jnp.where(col == t_local, jnp.float32(s * m), jnp.float32(0.0))

    if C % TC != 0:
        # Ragged class tail: lanes at/after C - kc*TC are garbage -> -inf.
        # Interior tiles see an all-true compare (C - kc*TC >= TC).
        z = jnp.where(col < (C - kc * TC), z, -jnp.inf)

    # Online logsumexp update (row-wise).
    m_prev = m_sc[...]
    m_new = jnp.maximum(m_prev, jnp.max(z, axis=-1, keepdims=True))
    l_sc[...] = l_sc[...] * jnp.exp(m_prev - m_new) + jnp.sum(
        jnp.exp(z - m_new), axis=-1, keepdims=True)
    m_sc[...] = m_new

    @pl.when(kc == pl.num_programs(1) - 1)
    def _():
        lse_ref[...] = m_sc[...] + jnp.log(l_sc[...])


def cosface_loss(logits, target, *, m=0.0, s=16.0, tb_max=256, tc_max=4096):
    """CosFace loss (mean CE over s*(logits - one_hot*m)).

    logits: (B, C) float32 or bfloat16 (bf16 is NOT upcast in HBM; the kernel
            upcasts in-register).  target: (B,) int.  Returns scalar f32.
    """
    B, C = logits.shape
    assert tb_max % 8 == 0 and tc_max % 128 == 0

    # --- Tile sizes (blocks never exceed array dims; no HBM padding) --------
    if B <= tb_max:
        if B > 8:
            # Split the "parallel" batch axis into >= 2 tiles so both v7x
            # TensorCores get work; harmless (one extra step) on v5e/v6e.
            TB = _round_up(-(-B // 2), 8)
        else:
            TB = B                     # full-dim block (allowed even if <8)
    else:
        TB = tb_max
    TC = C if C <= tc_max else tc_max  # full-dim block or 128-aligned tile

    grid = (pl.cdiv(B, TB), pl.cdiv(C, TC))

    t2d = target.astype(jnp.int32).reshape(B, 1)
    kernel = functools.partial(_cosface_lse_kernel,
                               s=float(s), m=float(m), C=C, TC=TC)

    lse = pl.pallas_call(
        kernel,
        out_shape=jax.ShapeDtypeStruct((B, 1), jnp.float32),
        grid_spec=pltpu.PrefetchScalarGridSpec(
            num_scalar_prefetch=0,
            grid=grid,
            in_specs=[
                # logits tile: advances over both batch and class axes
                pl.BlockSpec((TB, TC), lambda bi, kc: (bi, kc)),
                # target tile: depends only on the batch tile
                pl.BlockSpec((TB, 1), lambda bi, kc: (bi, 0)),
            ],
            out_specs=pl.BlockSpec((TB, 1), lambda bi, kc: (bi, 0)),
            scratch_shapes=[pltpu.VMEM((TB, 1), jnp.float32)] * 2,  # m_i, l_i
        ),
        compiler_params=pltpu.CompilerParams(
            dimension_semantics=("parallel", "arbitrary"),
            vmem_limit_bytes=32 * 1024 * 1024,
        ),
    )(logits, t2d)

    # Target logit gathered wrapper-side (B elements only, tiny vs. B*C read).
    x_t = jnp.take_along_axis(logits, target.astype(jnp.int32)[:, None], axis=1)
    x_t = x_t.astype(jnp.float32)[:, 0]
    nll = lse[:, 0] - s * (x_t - m)                          # per-example NLL
    return jnp.mean(nll)


def _reference(logits, target, *, m=0.0, s=16.0):
    x = logits.astype(jnp.float32)
    one_hot = jax.nn.one_hot(target, x.shape[1], dtype=x.dtype)
    z = s * (x - one_hot * m)
    logp = jax.nn.log_softmax(z, axis=-1)
    nll = -jnp.take_along_axis(logp, target[:, None], axis=1)[:, 0]
    return jnp.mean(nll)


if __name__ == "__main__":
    key = jax.random.PRNGKey(0)
    k1, k2, k3, k4, k5, k6 = jax.random.split(key, 6)

    # --- Test 1: module defaults (m=0, s=16), small shapes, single tile -----
    B, C = 8, 32
    logits = jax.random.uniform(k1, (B, C), minval=-1.0, maxval=1.0,
                                dtype=jnp.float32)
    target = jax.random.randint(k2, (B,), 0, C, dtype=jnp.int32)
    loss = jax.block_until_ready(cosface_loss(logits, target, m=0.0, s=16.0))
    ref = _reference(logits, target, m=0.0, s=16.0)
    assert jnp.allclose(loss, ref, atol=1e-4, rtol=1e-4), (loss, ref)

    # --- Test 2: ragged B and C, nonzero margin, multiple class tiles -------
    B2, C2 = 20, 300                   # TB=16 (2 batch tiles), TC=128 (3 tiles)
    logits2 = jax.random.uniform(k3, (B2, C2), minval=-1.0, maxval=1.0,
                                 dtype=jnp.float32)
    target2 = jax.random.randint(k4, (B2,), 0, C2, dtype=jnp.int32)
    loss2 = jax.block_until_ready(
        cosface_loss(logits2, target2, m=0.35, s=30.0, tc_max=128))
    ref2 = _reference(logits2, target2, m=0.35, s=30.0)
    assert jnp.allclose(loss2, ref2, atol=1e-4, rtol=1e-4), (loss2, ref2)

    # --- Test 3: bf16 logits pass straight through (no wrapper upcast) ------
    B3, C3 = 16, 384
    logits3 = jax.random.uniform(k5, (B3, C3), minval=-1.0, maxval=1.0,
                                 dtype=jnp.float32).astype(jnp.bfloat16)
    target3 = jax.random.randint(k6, (B3,), 0, C3, dtype=jnp.int32)
    loss3 = jax.block_until_ready(cosface_loss(logits3, target3, m=0.35, s=30.0))
    ref3 = _reference(logits3, target3, m=0.35, s=30.0)
    assert jnp.allclose(loss3, ref3, atol=1e-3, rtol=1e-3), (loss3, ref3)

    print("KERNEL_OK")
</pallas_src>

<mosaic_0001>
module attributes {stable_mosaic.version = 11 : i64} {
  func.func @_cosface_lse_kernel(%arg0: i32, %arg1: i32, %arg2: memref<8x32xf32, #tpu.memory_space<vmem>>, %arg3: memref<8x1xi32, #tpu.memory_space<vmem>>, %arg4: memref<8x1xf32, #tpu.memory_space<vmem>>, %arg5: memref<8x1xf32, #tpu.memory_space<vmem>>, %arg6: memref<8x1xf32, #tpu.memory_space<vmem>>) attributes {dimension_semantics = [#tpu.dimension_semantics<parallel>, #tpu.dimension_semantics<arbitrary>], iteration_bounds = array<i64: 1, 1>, scalar_prefetch = 0 : i64, scratch_operands = 2 : i64, tpu.core_type = #tpu.core_type<tc>, window_params = [{transform_indices = @transform_0, window_bounds = array<i64: 8, 32>}, {transform_indices = @transform_1, window_bounds = array<i64: 8, 1>}, {transform_indices = @transform_2, window_bounds = array<i64: 8, 1>}]} {
    %c0_i32 = arith.constant 0 : i32
    %0 = arith.cmpi eq, %arg1, %c0_i32 : i32
    %1 = arith.extui %0 : i1 to i32
    %c0_i32_0 = arith.constant 0 : i32
    %2 = arith.cmpi ne, %1, %c0_i32_0 : i32
    scf.if %2 {
      %cst_14 = arith.constant 0xFF800000 : f32
      %25 = vector.broadcast %cst_14 : f32 to vector<8x1xf32>
      %c0_15 = arith.constant 0 : index
      %c0_16 = arith.constant 0 : index
      %26 = vector.load %arg5[%c0_15, %c0_16] : memref<8x1xf32, #tpu.memory_space<vmem>>, vector<8x1xf32>
      tpu.vector_store %arg5[%c0_15, %c0_16], %25 {strides = array<i32>} : memref<8x1xf32, #tpu.memory_space<vmem>>, vector<8x1xf32>,
      %cst_17 = arith.constant 0.000000e+00 : f32
      %27 = vector.broadcast %cst_17 : f32 to vector<8x1xf32>
      %c0_18 = arith.constant 0 : index
      %c0_19 = arith.constant 0 : index
      %28 = vector.load %arg6[%c0_18, %c0_19] : memref<8x1xf32, #tpu.memory_space<vmem>>, vector<8x1xf32>
      tpu.vector_store %arg6[%c0_18, %c0_19], %27 {strides = array<i32>} : memref<8x1xf32, #tpu.memory_space<vmem>>, vector<8x1xf32>,
    } else {
    }
    %c0 = arith.constant 0 : index
    %c0_1 = arith.constant 0 : index
    %3 = vector.load %arg2[%c0, %c0_1] : memref<8x32xf32, #tpu.memory_space<vmem>>, vector<8x32xf32>
    %cst = arith.constant 1.600000e+01 : f32
    %4 = vector.broadcast %cst : f32 to vector<8x32xf32>
    %5 = arith.mulf %4, %3 : vector<8x32xf32>
    %c0_2 = arith.constant 0 : index
    %c0_3 = arith.constant 0 : index
    %6 = vector.load %arg5[%c0_2, %c0_3] : memref<8x1xf32, #tpu.memory_space<vmem>>, vector<8x1xf32>
    %cst_4 = arith.constant dense<0xFF800000> : vector<8xf32>
    %7 = vector.multi_reduction <maximumf>, %5, %cst_4 [1] : vector<8x32xf32> to vector<8xf32>
    %8 = vector.shape_cast %7 : vector<8xf32> to vector<8x1xf32>
    %9 = arith.maximumf %6, %8 : vector<8x1xf32>
    %c0_5 = arith.constant 0 : index
    %c0_6 = arith.constant 0 : index
    %10 = vector.load %arg6[%c0_5, %c0_6] : memref<8x1xf32, #tpu.memory_space<vmem>>, vector<8x1xf32>
    %11 = arith.subf %6, %9 : vector<8x1xf32>
    %12 = math.exp %11 : vector<8x1xf32>
    %13 = arith.mulf %10, %12 : vector<8x1xf32>
    %14 = vector.broadcast %9 : vector<8x1xf32> to vector<8x32xf32>
    %15 = arith.subf %5, %14 : vector<8x32xf32>
    %16 = math.exp %15 : vector<8x32xf32>
    %cst_7 = arith.constant dense<0.000000e+00> : vector<8xf32>
    %17 = vector.multi_reduction <add>, %16, %cst_7 [1] : vector<8x32xf32> to vector<8xf32>
    %18 = vector.shape_cast %17 : vector<8xf32> to vector<8x1xf32>
    %19 = arith.addf %13, %18 : vector<8x1xf32>
    %c0_8 = arith.constant 0 : index
    %c0_9 = arith.constant 0 : index
    %20 = vector.load %arg6[%c0_8, %c0_9] : memref<8x1xf32, #tpu.memory_space<vmem>>, vector<8x1xf32>
    tpu.vector_store %arg6[%c0_8, %c0_9], %19 {strides = array<i32>} : memref<8x1xf32, #tpu.memory_space<vmem>>, vector<8x1xf32>,
    %c0_10 = arith.constant 0 : index
    %c0_11 = arith.constant 0 : index
    %21 = vector.load %arg5[%c0_10, %c0_11] : memref<8x1xf32, #tpu.memory_space<vmem>>, vector<8x1xf32>
    tpu.vector_store %arg5[%c0_10, %c0_11], %9 {strides = array<i32>} : memref<8x1xf32, #tpu.memory_space<vmem>>, vector<8x1xf32>,
    %c0_i32_12 = arith.constant 0 : i32
    %22 = arith.cmpi eq, %arg1, %c0_i32_12 : i32
    %23 = arith.extui %22 : i1 to i32
    %c0_i32_13 = arith.constant 0 : i32
    %24 = arith.cmpi ne, %23, %c0_i32_13 : i32
    scf.if %24 {
      %c0_14 = arith.constant 0 : index
      %c0_15 = arith.constant 0 : index
      %25 = vector.load %arg5[%c0_14, %c0_15] : memref<8x1xf32, #tpu.memory_space<vmem>>, vector<8x1xf32>
      %c0_16 = arith.constant 0 : index
      %c0_17 = arith.constant 0 : index
      %26 = vector.load %arg6[%c0_16, %c0_17] : memref<8x1xf32, #tpu.memory_space<vmem>>, vector<8x1xf32>
      %27 = math.log %26 : vector<8x1xf32>
      %28 = arith.addf %25, %27 : vector<8x1xf32>
      %c0_18 = arith.constant 0 : index
      %c0_19 = arith.constant 0 : index
      %29 = vector.load %arg4[%c0_18, %c0_19] : memref<8x1xf32, #tpu.memory_space<vmem>>, vector<8x1xf32>
      tpu.vector_store %arg4[%c0_18, %c0_19], %28 {strides = array<i32>} : memref<8x1xf32, #tpu.memory_space<vmem>>, vector<8x1xf32>,
    } else {
    }
    return
  }
  func.func @transform_0(%arg0: i32, %arg1: i32) -> (i32, i32) {
    %c0_i32 = arith.constant 0 : i32
    return %arg0, %arg1 : i32, i32
  }
  func.func @transform_1(%arg0: i32, %arg1: i32) -> (i32, i32) {
    %c0_i32 = arith.constant 0 : i32
    %c0_i32_0 = arith.constant 0 : i32
    return %arg0, %c0_i32 : i32, i32
  }
  func.func @transform_2(%arg0: i32, %arg1: i32) -> (i32, i32) {
    %c0_i32 = arith.constant 0 : i32
    %c0_i32_0 = arith.constant 0 : i32
    return %arg0, %c0_i32 : i32, i32
  }
}

</mosaic_0001>

<llo_original>
// kernel: tpu_custom_call.1
$region0: #{tpu_custom_call.1}
  #allocation0 [shape = 'u32[]', space=smem, size = 0x4, offset = 0x4, fixed_abs, tag = 'smem constant byte address 0x4 - core index']
  #allocation1 [shape = 'u32[144,128]{1,0:T(1,128)}', space=vmem, size = 0x12000, scoped, tag = 'internal scratch']
  #allocation2 [shape = 'f32[8,1]{1,0:T(8,128)}', space=vmem, size = 0x1000, scoped, tag = 'scratch operand']
  #allocation3 [shape = 'f32[8,1]{1,0:T(8,128)}', space=vmem, size = 0x1000, scoped, tag = 'scratch operand']
  %s0 = inlined_call_operand.vmem [shape: f32[8,32], index: 0, kind: input, shape index: {}]
  %s1 = inlined_call_operand.vmem [shape: s32[8,1], index: 1, kind: input, shape index: {}]
  %s2 = inlined_call_operand.vmem [shape: f32[8,1], index: 2, kind: output, shape index: {}]
  %s3 = sld [smem:[#allocation0]]
  $region26: #{tpu_custom_call.1} parent=0
    _
  %s5 = ssub.s32 1, %s3
  %s6 = scalar_select 0, %s5, %s3
  // Predicated region
  $region2: #{tpu_custom_call.1} parent=0 // pred_check
    _
  $region3: #{tpu_custom_call.1} parent=0 // pred_check_branch
    %8 = sbr.rel (0) target = $region5
  $region4: #{tpu_custom_call.1} parent=0 // pred_region
    _
  $region5: #{tpu_custom_call.1} parent=0 // pred_fallthru
    _
  // Predicated region
  $region6: #{tpu_custom_call.1} parent=0 // pred_check
    _
  $region7: #{tpu_custom_call.1} parent=0 // pred_check_branch
    %10 = sbr.rel (0) target = $region9
  $region8: #{tpu_custom_call.1} parent=0 // pred_region
    _
  $region9: #{tpu_custom_call.1} parent=0 // pred_fallthru
    _
  %p11 = scmp.eq.s32.totalorder 0, 0
  // Predicated region
  $region10: #{tpu_custom_call.1} parent=0 // pred_check
    %p12 = pneg %p11
  $region11: #{tpu_custom_call.1} parent=0 // pred_check_branch
    %14 = sbr.rel (%p12) target = $region13
  $region12: #{tpu_custom_call.1} parent=0 // pred_region
    %vm15 = vcmask 7168
    %16 = vst.msk [vmem:[#allocation2] sm:$0xff] %vm15, -inf
    %17 = vst.msk [vmem:[#allocation3] sm:$0xff] %vm15, 0.0
  $region13: #{tpu_custom_call.1} parent=0 // pred_fallthru
    _
  %v18 = vld [vmem:[%s0] sm:$0xff]
  %v19 = vmul.f32 %v18, 16.0
  %v20 = vld [vmem:[#allocation2] sm:$0xff]
  %vm21 = vcmask 261120
  %v22 = vsel %vm21, %v19, -inf
  %23 = vmax.xlane.f32.xlu0 %v22
  %v24 = vpop.xlane.xlu0 %23
  %v25 = vmax.f32 %v20, %v24
  %v26 = vld [vmem:[#allocation3] sm:$0xff]
  %v27 = vsub.f32 %v20, %v25
  %v28 = vmul.f32 %v27, 1.442695
  %v29 = vpow.pop %v28
  %v30 = vmul.f32 %v26, %v29
  %32 = vset.pattern.permute.xlu0 0
  %33 = vperm.xlu0 %32, %v25
  %v34 = vpop.permute.xlu0 %33
  %v36 = vsub.f32 %v19, %v34
  %v37 = vmul.f32 %v36, 1.442695
  %v38 = vpow.pop %v37
  %v39 = vsel %vm21, %v38, 0.0
  %40 = vadd.xlane.f32.xlu0 %v39
  %v41 = vpop.xlane.xlu0 %40
  %v42 = vadd.f32 %v30, %v41
  %vm43 = vcmask 7168
  %44 = vst.msk [vmem:[#allocation3] sm:$0xff] %vm43, %v42
  %45 = vst.msk [vmem:[#allocation2] sm:$0xff] %vm43, %v25
  // Predicated region
  $region14: #{tpu_custom_call.1} parent=0 // pred_check
    %p46 = pneg %p11
  $region15: #{tpu_custom_call.1} parent=0 // pred_check_branch
    %48 = sbr.rel (%p46) target = $region17
  $region16: #{tpu_custom_call.1} parent=0 // pred_region
    %v49 = vld [vmem:[#allocation2] sm:$0xff]
    %v50 = vld [vmem:[#allocation3] sm:$0xff]
    %v51 = vlog2.pop %v50
    %v52 = vmul.f32 %v51, 0.6931472
    %v53 = vadd.f32 %v49, %v52
    %54 = vst.msk [vmem:[%s2] sm:$0xff] %vm43, %v53
  $region17: #{tpu_custom_call.1} parent=0 // pred_fallthru
    _
  // Predicated region
  $region18: #{tpu_custom_call.1} parent=0 // pred_check
    _
  $region19: #{tpu_custom_call.1} parent=0 // pred_check_branch
    %56 = sbr.rel (0) target = $region21
  $region20: #{tpu_custom_call.1} parent=0 // pred_region
    _
  $region21: #{tpu_custom_call.1} parent=0 // pred_fallthru
    _
  // Predicated region
  $region22: #{tpu_custom_call.1} parent=0 // pred_check
    _
  $region23: #{tpu_custom_call.1} parent=0 // pred_check_branch
    %58 = sbr.rel (0) target = $region25
  $region24: #{tpu_custom_call.1} parent=0 // pred_region
    _
  $region25: #{tpu_custom_call.1} parent=0 // pred_fallthru
    _

</llo_original>
